<compile_context>
chip_gen: v5e
topology: v5e:2x2
jax: 0.10.0
libtpu: 0.0.40
codegen_flags: <defaults>
</compile_context>

<pallas_src>
import functools

import jax
import jax.numpy as jnp
from jax.experimental import pallas as pl
from jax.experimental.pallas import tpu as pltpu

MULT = 2.0       # self.mult from ClassifierCopyFCN(mult=2)
LANE = 128
BATCH_PAD = 16   # bf16 sublane pack (16 rows / vreg)
MAX_TB = 256     # batch tile (MXU row width on v6e/v7x)
MAX_TK = 512     # K (input-feature) tile; conservative for v5e / v7x VMEM budgets


def _round_up(x, m):
    return ((x + m - 1) // m) * m


def _k_tiling(d_in):
    """Pick the K tile and the padded input-feature length (both multiples of 128)."""
    d_aligned = _round_up(d_in, LANE)
    tk = min(MAX_TK, d_aligned)
    d_pad = _round_up(d_aligned, tk)
    return tk, d_pad


def _copyfcn_kernel(x_ref, w1t_ref, b1_ref, w2t_ref, b2_ref, o_ref, acc_ref):
    # x_ref:  (tb, tk)       f32 flattened-input tile (cast to bf16 in-kernel)
    # w1t_ref:(tk, H_pad)    bf16 hidden weight tile, pre-transposed
    # b1_ref: (1, H_pad)     f32 fresh hidden bias (resident)
    # w2t_ref:(H_pad, C_pad) f32 output weight, pre-transposed, *mult folded (resident)
    # b2_ref: (1, C_pad)     f32 fresh output bias, *mult folded (resident)
    # o_ref:  (tb, C_pad)    f32 output tile (lane-dense store)
    # acc_ref:(tb, H_pad)    f32 VMEM accumulator for the K reduction
    k = pl.program_id(1)

    @pl.when(k == 0)
    def _():
        acc_ref[...] = jnp.zeros_like(acc_ref)

    x = x_ref[...].astype(jnp.bfloat16)            # free VPU cast under the MXU
    acc_ref[...] += jnp.dot(x, w1t_ref[...], preferred_element_type=jnp.float32)

    @pl.when(k == pl.num_programs(1) - 1)
    def _():
        h = jnp.maximum(acc_ref[...] + b1_ref[...], 0.0)      # fresh bias + ReLU, f32
        out = jnp.dot(h, w2t_ref[...], preferred_element_type=jnp.float32) + b2_ref[...]
        o_ref[...] = out.astype(o_ref.dtype)                  # *mult already folded in


def prepare_params(w1, b1, w2, b2, mult=MULT):
    """One-time parameter prep (call OUTSIDE the per-step forward):
    transpose to (in, out), fold `mult` into the output layer, pad hidden/class/K
    dims to lane/tile multiples, cast the big hidden weight to bf16."""
    h_keep, d_in = w1.shape
    n_cls = w2.shape[0]
    h_pad = _round_up(h_keep, LANE)   # TODO(synk): 256 on v6e/v7x when compute-bound
    c_pad = _round_up(n_cls, LANE)
    _, d_pad = _k_tiling(d_in)

    w1t = jnp.transpose(w1).astype(jnp.float32)                     # (d_in, h_keep)
    w1t = jnp.pad(w1t, ((0, d_pad - d_in), (0, h_pad - h_keep))).astype(jnp.bfloat16)
    b1p = jnp.pad(b1.reshape(1, h_keep).astype(jnp.float32), ((0, 0), (0, h_pad - h_keep)))
    w2t = jnp.transpose(w2).astype(jnp.float32) * mult              # (h_keep, n_cls)
    w2t = jnp.pad(w2t, ((0, h_pad - h_keep), (0, c_pad - n_cls)))   # stays f32 (tiny GEMM)
    b2p = jnp.pad(b2.reshape(1, n_cls).astype(jnp.float32) * mult, ((0, 0), (0, c_pad - n_cls)))
    return w1t, b1p, w2t, b2p, n_cls


@functools.partial(jax.jit, static_argnames=("n_cls",))
def classifier_copy_fcn_forward(x_nchw, w1t, b1p, w2t, b2p, n_cls):
    """x_nchw: (B, C, H, W).  Prepared params from prepare_params()."""
    B = x_nchw.shape[0]
    x_flat = x_nchw.reshape(B, -1).astype(jnp.float32)   # torch.flatten(x, 1); stays f32
    d_in = x_flat.shape[1]

    tk, d_pad = _k_tiling(d_in)
    d_pad = w1t.shape[0]                                 # must agree with prepare_params
    h_pad = w1t.shape[1]
    c_pad = w2t.shape[1]

    b16 = _round_up(B, BATCH_PAD)
    tb = min(MAX_TB, b16)
    b_pad = _round_up(b16, tb)
    if (b_pad, d_pad) != (B, d_in):
        x_flat = jnp.pad(x_flat, ((0, b_pad - B), (0, d_pad - d_in)))

    n_b = b_pad // tb
    n_k = d_pad // tk
    grid = (n_b, n_k)

    # VMEM budget (double-buffered inputs/outputs + resident scratch), with headroom.
    vmem_est = (2 * tb * tk * 4 + 2 * tk * h_pad * 2 + 2 * h_pad * 4
                + 2 * h_pad * c_pad * 4 + 2 * c_pad * 4 + 2 * tb * c_pad * 4
                + tb * h_pad * 4)
    vmem_limit = int(min(48 * 1024 * 1024, max(2 * vmem_est, 8 * 1024 * 1024)))

    flops = 2 * b_pad * (d_pad * h_pad + h_pad * c_pad)
    bytes_accessed = (b_pad * d_pad * 4 + n_b * d_pad * h_pad * 2
                      + h_pad * c_pad * 4 + (h_pad + c_pad) * 4 + b_pad * c_pad * 4)

    out = pl.pallas_call(
        _copyfcn_kernel,
        out_shape=jax.ShapeDtypeStruct((b_pad, c_pad), jnp.float32),
        grid_spec=pltpu.PrefetchScalarGridSpec(
            num_scalar_prefetch=0,
            grid=grid,
            in_specs=[
                pl.BlockSpec((tb, tk), lambda i, k: (i, k)),       # x tile
                pl.BlockSpec((tk, h_pad), lambda i, k: (k, 0)),    # w1t K-tile
                pl.BlockSpec((1, h_pad), lambda i, k: (0, 0)),     # b1 (resident)
                pl.BlockSpec((h_pad, c_pad), lambda i, k: (0, 0)), # w2t (resident)
                pl.BlockSpec((1, c_pad), lambda i, k: (0, 0)),     # b2 (resident)
            ],
            out_specs=pl.BlockSpec((tb, c_pad), lambda i, k: (i, 0)),
            scratch_shapes=[pltpu.VMEM((tb, h_pad), jnp.float32)],
        ),
        compiler_params=pltpu.CompilerParams(
            dimension_semantics=("parallel", "arbitrary"),
            vmem_limit_bytes=vmem_limit),
        cost_estimate=pl.CostEstimate(
            flops=flops, transcendentals=0, bytes_accessed=bytes_accessed),
    )(x_flat, w1t, b1p, w2t, b2p)

    return out[:B, :n_cls]


def build_params(key, input_dim, width, num_classes, keep=0.5):
    """Deterministically build the 'copied' network params, mimicking
    ClassifierCopyFCN's row/column sub-selection of a trained FCN."""
    k_w1, k_w2, k_b1, k_b2, k_perm = jax.random.split(key, 5)

    # original (synthetic) FCN weights, PyTorch (out, in) layout
    w1_full = jax.random.normal(k_w1, (width, input_dim), jnp.float32) * 0.02
    w2_full = jax.random.normal(k_w2, (num_classes, width), jnp.float32) * 0.02

    keep_out = round(keep * width)
    select = jnp.sort(jax.random.permutation(k_perm, width)[:keep_out])  # sorted kept units

    w1 = w1_full[select, :]   # layer.weight[select, select_prev] -> (keep_out, input_dim)
    w2 = w2_full[:, select]   # output layer keeps all rows, selected columns
    # biases are NOT copied in ClassifierCopyFCN: the new nn.Linear gets fresh biases
    b1 = jax.random.uniform(k_b1, (keep_out,), jnp.float32, -0.05, 0.05)
    b2 = jax.random.uniform(k_b2, (num_classes,), jnp.float32, -0.05, 0.05)
    return w1, b1, w2, b2


if __name__ == "__main__":
    key = jax.random.PRNGKey(0)
    k_x, k_p = jax.random.split(key)

    B, C, H, W = 2, 4, 16, 16          # input NCHW
    input_dim = C * H * W              # 1024  -> tk=512, n_k=2 (exercises the reduction)
    width = 256                        # FCN hidden width
    num_classes = 10
    keep = 0.5                         # -> 128 kept hidden units

    x = jax.random.normal(k_x, (B, C, H, W), jnp.float32)
    w1, b1, w2, b2 = build_params(k_p, input_dim, width, num_classes, keep)

    # one-time param prep (transpose, bf16 cast of w1, mult fold, lane/tile padding)
    w1t, b1p, w2t, b2p, n_cls = prepare_params(w1, b1, w2, b2)
    w1t, b1p, w2t, b2p = jax.block_until_ready((w1t, b1p, w2t, b2p))

    out = classifier_copy_fcn_forward(x, w1t, b1p, w2t, b2p, n_cls)
    out = jax.block_until_ready(out)

    # reference check in plain JAX (f32 reference; bf16 first GEMM -> looser tolerance)
    x_flat = x.reshape(B, -1)
    ref = (jnp.maximum(x_flat @ w1.T + b1, 0.0) @ w2.T + b2) * MULT
    assert out.shape == (B, num_classes)
    assert jnp.allclose(out, ref, atol=3e-2, rtol=3e-2), (
        jnp.max(jnp.abs(out - ref)))

    print("KERNEL_OK")
</pallas_src>

<mosaic_0001>
module attributes {stable_mosaic.version = 11 : i64} {
  func.func @_copyfcn_kernel(%arg0: i32, %arg1: i32, %arg2: memref<16x512xf32, #tpu.memory_space<vmem>>, %arg3: memref<512x128xbf16, #tpu.memory_space<vmem>>, %arg4: memref<1x128xf32, #tpu.memory_space<vmem>>, %arg5: memref<128x128xf32, #tpu.memory_space<vmem>>, %arg6: memref<1x128xf32, #tpu.memory_space<vmem>>, %arg7: memref<16x128xf32, #tpu.memory_space<vmem>>, %arg8: memref<16x128xf32, #tpu.memory_space<vmem>>) attributes {dimension_semantics = [#tpu.dimension_semantics<parallel>, #tpu.dimension_semantics<arbitrary>], iteration_bounds = array<i64: 1, 2>, scalar_prefetch = 0 : i64, scratch_operands = 1 : i64, tpu.core_type = #tpu.core_type<tc>, window_params = [{transform_indices = @transform_0, window_bounds = array<i64: 16, 512>}, {transform_indices = @transform_1, window_bounds = array<i64: 512, 128>}, {pipeline_mode = #tpu.pipeline_mode<synchronous>, transform_indices = @transform_2, window_bounds = array<i64: 1, 128>}, {pipeline_mode = #tpu.pipeline_mode<synchronous>, transform_indices = @transform_3, window_bounds = array<i64: 128, 128>}, {pipeline_mode = #tpu.pipeline_mode<synchronous>, transform_indices = @transform_4, window_bounds = array<i64: 1, 128>}, {transform_indices = @transform_5, window_bounds = array<i64: 16, 128>}]} {
    %c0_i32 = arith.constant 0 : i32
    %0 = arith.cmpi eq, %arg1, %c0_i32 : i32
    %1 = arith.extui %0 : i1 to i32
    %c0_i32_0 = arith.constant 0 : i32
    %2 = arith.cmpi ne, %1, %c0_i32_0 : i32
    scf.if %2 {
      %cst_9 = arith.constant 0.000000e+00 : f32
      %13 = vector.broadcast %cst_9 : f32 to vector<16x128xf32>
      %c0_10 = arith.constant 0 : index
      %c0_11 = arith.constant 0 : index
      %14 = vector.load %arg8[%c0_10, %c0_11] : memref<16x128xf32, #tpu.memory_space<vmem>>, vector<16x128xf32>
      tpu.vector_store %arg8[%c0_10, %c0_11], %13 {strides = array<i32>} : memref<16x128xf32, #tpu.memory_space<vmem>>, vector<16x128xf32>,
    } else {
    }
    %c0 = arith.constant 0 : index
    %c0_1 = arith.constant 0 : index
    %3 = vector.load %arg2[%c0, %c0_1] : memref<16x512xf32, #tpu.memory_space<vmem>>, vector<16x512xf32>
    %4 = arith.truncf %3 : vector<16x512xf32> to vector<16x512xbf16>
    %c0_2 = arith.constant 0 : index
    %c0_3 = arith.constant 0 : index
    %5 = vector.load %arg8[%c0_2, %c0_3] : memref<16x128xf32, #tpu.memory_space<vmem>>, vector<16x128xf32>
    %c0_4 = arith.constant 0 : index
    %c0_5 = arith.constant 0 : index
    %6 = vector.load %arg3[%c0_4, %c0_5] : memref<512x128xbf16, #tpu.memory_space<vmem>>, vector<512x128xbf16>
    %cst = arith.constant dense<0.000000e+00> : vector<16x128xf32>
    %7 = tpu.matmul %4, %6, %cst {dimension_numbers = #tpu.dot_dimension_numbers<[1], [0], [0], [1], [0, 0, 1, 1], [], []>} : vector<16x512xbf16>, vector<512x128xbf16>, vector<16x128xf32> -> vector<16x128xf32>
    %8 = arith.addf %5, %7 : vector<16x128xf32>
    %c0_6 = arith.constant 0 : index
    %c0_7 = arith.constant 0 : index
    %9 = vector.load %arg8[%c0_6, %c0_7] : memref<16x128xf32, #tpu.memory_space<vmem>>, vector<16x128xf32>
    tpu.vector_store %arg8[%c0_6, %c0_7], %8 {strides = array<i32>} : memref<16x128xf32, #tpu.memory_space<vmem>>, vector<16x128xf32>,
    %c1_i32 = arith.constant 1 : i32
    %10 = arith.cmpi eq, %arg1, %c1_i32 : i32
    %11 = arith.extui %10 : i1 to i32
    %c0_i32_8 = arith.constant 0 : i32
    %12 = arith.cmpi ne, %11, %c0_i32_8 : i32
    scf.if %12 {
      %c0_9 = arith.constant 0 : index
      %c0_10 = arith.constant 0 : index
      %13 = vector.load %arg8[%c0_9, %c0_10] : memref<16x128xf32, #tpu.memory_space<vmem>>, vector<16x128xf32>
      %c0_11 = arith.constant 0 : index
      %c0_12 = arith.constant 0 : index
      %14 = vector.load %arg4[%c0_11, %c0_12] : memref<1x128xf32, #tpu.memory_space<vmem>>, vector<1x128xf32>
      %15 = vector.broadcast %14 : vector<1x128xf32> to vector<16x128xf32>
      %16 = arith.addf %13, %15 : vector<16x128xf32>
      %cst_13 = arith.constant 0.000000e+00 : f32
      %17 = vector.broadcast %cst_13 : f32 to vector<16x128xf32>
      %18 = arith.maximumf %16, %17 : vector<16x128xf32>
      %c0_14 = arith.constant 0 : index
      %c0_15 = arith.constant 0 : index
      %19 = vector.load %arg5[%c0_14, %c0_15] : memref<128x128xf32, #tpu.memory_space<vmem>>, vector<128x128xf32>
      %cst_16 = arith.constant dense<0.000000e+00> : vector<16x128xf32>
      %20 = tpu.matmul %18, %19, %cst_16 {dimension_numbers = #tpu.dot_dimension_numbers<[1], [0], [0], [1], [0, 0, 1, 1], [], []>} : vector<16x128xf32>, vector<128x128xf32>, vector<16x128xf32> -> vector<16x128xf32>
      %c0_17 = arith.constant 0 : index
      %c0_18 = arith.constant 0 : index
      %21 = vector.load %arg6[%c0_17, %c0_18] : memref<1x128xf32, #tpu.memory_space<vmem>>, vector<1x128xf32>
      %22 = vector.broadcast %21 : vector<1x128xf32> to vector<16x128xf32>
      %23 = arith.addf %20, %22 : vector<16x128xf32>
      %c0_19 = arith.constant 0 : index
      %c0_20 = arith.constant 0 : index
      %24 = vector.load %arg7[%c0_19, %c0_20] : memref<16x128xf32, #tpu.memory_space<vmem>>, vector<16x128xf32>
      tpu.vector_store %arg7[%c0_19, %c0_20], %23 {strides = array<i32>} : memref<16x128xf32, #tpu.memory_space<vmem>>, vector<16x128xf32>,
    } else {
    }
    return
  }
  func.func @transform_0(%arg0: i32, %arg1: i32) -> (i32, i32) {
    %c0_i32 = arith.constant 0 : i32
    return %arg0, %arg1 : i32, i32
  }
  func.func @transform_1(%arg0: i32, %arg1: i32) -> (i32, i32) {
    %c0_i32 = arith.constant 0 : i32
    %c0_i32_0 = arith.constant 0 : i32
    return %arg1, %c0_i32 : i32, i32
  }
  func.func @transform_2(%arg0: i32, %arg1: i32) -> (i32, i32) {
    %c0_i32 = arith.constant 0 : i32
    %c0_i32_0 = arith.constant 0 : i32
    %c0_i32_1 = arith.constant 0 : i32
    return %c0_i32, %c0_i32_0 : i32, i32
  }
  func.func @transform_3(%arg0: i32, %arg1: i32) -> (i32, i32) {
    %c0_i32 = arith.constant 0 : i32
    %c0_i32_0 = arith.constant 0 : i32
    %c0_i32_1 = arith.constant 0 : i32
    return %c0_i32, %c0_i32_0 : i32, i32
  }
  func.func @transform_4(%arg0: i32, %arg1: i32) -> (i32, i32) {
    %c0_i32 = arith.constant 0 : i32
    %c0_i32_0 = arith.constant 0 : i32
    %c0_i32_1 = arith.constant 0 : i32
    return %c0_i32, %c0_i32_0 : i32, i32
  }
  func.func @transform_5(%arg0: i32, %arg1: i32) -> (i32, i32) {
    %c0_i32 = arith.constant 0 : i32
    %c0_i32_0 = arith.constant 0 : i32
    return %arg0, %c0_i32 : i32, i32
  }
}

</mosaic_0001>

<llo_original>
// kernel: classifier_copy_fcn_forward.1
$region0: #{classifier_copy_fcn_forward.1}
  #allocation0 [shape = 'u32[]', space=smem, size = 0x4, offset = 0x4, fixed_abs, tag = 'smem constant byte address 0x4 - core index']
  #allocation1 [shape = 'u32[72,128]{1,0:T(1,128)}', space=vmem, size = 0x9000, scoped, tag = 'internal scratch']
  #allocation2 [shape = 'f32[16,128]{1,0:T(8,128)}', space=vmem, size = 0x2000, scoped, tag = 'scratch operand']
  %s0 = inlined_call_operand.vmem [shape: f32[16,1024], index: 0, kind: input, shape index: {}]
  %s1 = inlined_call_operand.hbm [shape: bf16[1024,128], index: 1, kind: input, shape index: {}]
  %s2 = inlined_call_operand.vmem [shape: f32[1,128], index: 2, kind: input, shape index: {}]
  %s3 = inlined_call_operand.vmem [shape: f32[128,128], index: 3, kind: input, shape index: {}]
  %s4 = inlined_call_operand.vmem [shape: f32[1,128], index: 4, kind: input, shape index: {}]
  %s5 = inlined_call_operand.vmem [shape: f32[16,128], index: 5, kind: output, shape index: {}]
  %s6 = sld [smem:[#allocation0]]
  $region88: #{classifier_copy_fcn_forward.1} parent=0
    _
  %s8 = ssub.s32 1, %s6
  %s9 = scalar_select 0, %s8, %s6
  $region1: #{classifier_copy_fcn_forward.1} parent=0
    #allocation3 [shape = 'u8[65536]{0}', space=vmem, size = 0x10000, scoped, tag = 'input window, operand 0']
    #allocation4 [shape = 'u8[262144]{0}', space=vmem, size = 0x40000, scoped, tag = 'input window, operand 1']
    #allocation5 [shape = 's32[2]{0}', space=sflag, size = 0x8, scoped, tag = 'scoped memory for classifier_copy_fcn_forward.1']
    %10 = vsyncpa [#allocation5], 0
    %s11 = scalar_lea.sflag [#allocation5], 1
    %12 = vsyncpa %s11, 0
    loop: start=0, step=1, limit=4
    $region2: #{classifier_copy_fcn_forward.1} parent=1 // loop_pre_header
      _
    $region3: #{classifier_copy_fcn_forward.1} parent=1 // loop_header
      %s14 = sphi 0, %s18
      %p15 = scmp.ge.s32.totalorder %s14, 4
      %s21 = sphi 0, %s33
      %s22 = sphi 0, %s29
      %s23 = sphi 0, %s21
      %s24 = sphi 0, %s22
      %s25 = sphi 0, %s23
      %s26 = sphi 0, %s24
      %s38 = sphi 0, %s40
      %s41 = sphi 0, %s38
      %s42 = sphi 0, %s41
      %s58 = sphi 0, %s42
      %s64 = sphi 0, %s66
      %s67 = sphi 0, %s64
      %s68 = sphi 0, %s67
      %s84 = sphi 0, %s68
      %s88 = sphi 0, %s88
      %s90 = sphi 0, %s88
      %s91 = sphi 0, %s90
      %s105 = sphi 0, %s91
      %s109 = sphi 0, %s109
      %s111 = sphi 0, %s109
      %s112 = sphi 0, %s111
      %s126 = sphi 0, %s112
      %s130 = sphi 0, %s130
      %s132 = sphi 0, %s130
      %s133 = sphi 0, %s132
      %s147 = sphi 0, %s133
      %s153 = sphi 0, %s155
      %s156 = sphi 0, %s153
      %s157 = sphi 0, %s156
      %s173 = sphi 0, %s157
    $region4: #{classifier_copy_fcn_forward.1} parent=1 // loop_header_branch
      %17 = sbr.rel (%p15) target = $region8
    $region5: #{classifier_copy_fcn_forward.1} parent=1 // loop_body
      %s19 = ssub.s32 %s14, 1
      %s20 = ssub.s32 %s14, 2
      %s27 = sadd.s32 1, %s22
      %p28 = scmp.ge.s32.totalorder %s27, 2
      %s29 = scalar_select %p28, 0, %s27
      %s30 = sadd.s32 1, %s21
      %s31 = scalar_select %p28, %s30, %s21
      %p32 = scmp.ge.s32.totalorder %s31, 1
      %s33 = scalar_select %p32, 0, %s31
      %s34 = ssub.s32 %s21, %s33
      %s35 = ssub.s32 %s22, %s29
      %s36 = sor.u32 %s34, %s35
      %p37 = scmp.eq.s32.totalorder %s36, 0
      %s39 = sadd.s32 %s38, 1
      %s40 = scalar_select %p37, %s38, %s39
      %p43 = pneg %p37
      %p44 = scmp.eq.s32.totalorder %s14, 1
      %p45 = por %p43, %p44
      %p46 = scmp.ne.s32.totalorder %s38, %s41
      %p47 = scmp.eq.s32.totalorder %s14, 0
      %p48 = por %p46, %p47
      %p49 = scmp.ne.s32.totalorder %s38, %s41
      %p50 = scmp.eq.s32.totalorder %s19, 1
      %p51 = por %p49, %p50
      %p52 = scmp.ne.s32.totalorder %s41, %s42
      %p53 = scmp.eq.s32.totalorder %s19, 0
      %p54 = por %p52, %p53
      %p55 = scmp.ne.s32.totalorder %s41, %s42
      %p56 = scmp.eq.s32.totalorder %s20, 1
      %p57 = por %p55, %p56
      %p59 = scmp.ne.s32.totalorder %s42, %s58
      %p60 = scmp.eq.s32.totalorder %s20, 0
      %p61 = por %p59, %p60
      %s62 = ssub.s32 %s22, %s29
      %p63 = scmp.eq.s32.totalorder %s62, 0
      %s65 = sadd.s32 %s64, 1
      %s66 = scalar_select %p63, %s64, %s65
      %p69 = pneg %p63
      %p70 = scmp.eq.s32.totalorder %s14, 1
      %p71 = por %p69, %p70
      %p72 = scmp.ne.s32.totalorder %s64, %s67
      %p73 = scmp.eq.s32.totalorder %s14, 0
      %p74 = por %p72, %p73
      %p75 = scmp.ne.s32.totalorder %s64, %s67
      %p76 = scmp.eq.s32.totalorder %s19, 1
      %p77 = por %p75, %p76
      %p78 = scmp.ne.s32.totalorder %s67, %s68
      %p79 = scmp.eq.s32.totalorder %s19, 0
      %p80 = por %p78, %p79
      %p81 = scmp.ne.s32.totalorder %s67, %s68
      %p82 = scmp.eq.s32.totalorder %s20, 1
      %p83 = por %p81, %p82
      %p85 = scmp.ne.s32.totalorder %s68, %s84
      %p86 = scmp.eq.s32.totalorder %s20, 0
      %p87 = por %p85, %p86
      %s89 = sadd.s32 %s88, 1
      %p92 = scmp.eq.s32.totalorder %s14, 1
      %p93 = scmp.ne.s32.totalorder %s88, %s90
      %p94 = scmp.eq.s32.totalorder %s14, 0
      %p95 = por %p93, %p94
      %p96 = scmp.ne.s32.totalorder %s88, %s90
      %p97 = scmp.eq.s32.totalorder %s19, 1
      %p98 = por %p96, %p97
      %p99 = scmp.ne.s32.totalorder %s90, %s91
      %p100 = scmp.eq.s32.totalorder %s19, 0
      %p101 = por %p99, %p100
      %p102 = scmp.ne.s32.totalorder %s90, %s91
      %p103 = scmp.eq.s32.totalorder %s20, 1
      %p104 = por %p102, %p103
      %p106 = scmp.ne.s32.totalorder %s91, %s105
      %p107 = scmp.eq.s32.totalorder %s20, 0
      %p108 = por %p106, %p107
      %s110 = sadd.s32 %s109, 1
      %p113 = scmp.eq.s32.totalorder %s14, 1
      %p114 = scmp.ne.s32.totalorder %s109, %s111
      %p115 = scmp.eq.s32.totalorder %s14, 0
      %p116 = por %p114, %p115
      %p117 = scmp.ne.s32.totalorder %s109, %s111
      %p118 = scmp.eq.s32.totalorder %s19, 1
      %p119 = por %p117, %p118
      %p120 = scmp.ne.s32.totalorder %s111, %s112
      %p121 = scmp.eq.s32.totalorder %s19, 0
      %p122 = por %p120, %p121
      %p123 = scmp.ne.s32.totalorder %s111, %s112
      %p124 = scmp.eq.s32.totalorder %s20, 1
      %p125 = por %p123, %p124
      %p127 = scmp.ne.s32.totalorder %s112, %s126
      %p128 = scmp.eq.s32.totalorder %s20, 0
      %p129 = por %p127, %p128
      %s131 = sadd.s32 %s130, 1
      %p134 = scmp.eq.s32.totalorder %s14, 1
      %p135 = scmp.ne.s32.totalorder %s130, %s132
      %p136 = scmp.eq.s32.totalorder %s14, 0
      %p137 = por %p135, %p136
      %p138 = scmp.ne.s32.totalorder %s130, %s132
      %p139 = scmp.eq.s32.totalorder %s19, 1
      %p140 = por %p138, %p139
      %p141 = scmp.ne.s32.totalorder %s132, %s133
      %p142 = scmp.eq.s32.totalorder %s19, 0
      %p143 = por %p141, %p142
      %p144 = scmp.ne.s32.totalorder %s132, %s133
      %p145 = scmp.eq.s32.totalorder %s20, 1
      %p146 = por %p144, %p145
      %p148 = scmp.ne.s32.totalorder %s133, %s147
      %p149 = scmp.eq.s32.totalorder %s20, 0
      %p150 = por %p148, %p149
      %s151 = ssub.s32 %s21, %s33
      %p152 = scmp.eq.s32.totalorder %s151, 0
      %s154 = sadd.s32 %s153, 1
      %s155 = scalar_select %p152, %s153, %s154
      %p158 = pneg %p152
      %p159 = scmp.eq.s32.totalorder %s14, 1
      %p160 = por %p158, %p159
      %p161 = scmp.ne.s32.totalorder %s153, %s156
      %p162 = scmp.eq.s32.totalorder %s14, 0
      %p163 = por %p161, %p162
      %p164 = scmp.ne.s32.totalorder %s153, %s156
      %p165 = scmp.eq.s32.totalorder %s19, 1
      %p166 = por %p164, %p165
      %p167 = scmp.ne.s32.totalorder %s156, %s157
      %p168 = scmp.eq.s32.totalorder %s19, 0
      %p169 = por %p167, %p168
      %p170 = scmp.ne.s32.totalorder %s156, %s157
      %p171 = scmp.eq.s32.totalorder %s20, 1
      %p172 = por %p170, %p171
      %p174 = scmp.ne.s32.totalorder %s157, %s173
      %p175 = scmp.eq.s32.totalorder %s20, 0
      %p176 = por %p174, %p175
      %p177 = scmp.le.s32.totalorder 1, %s14
      %p178 = scmp.lt.s32.totalorder %s14, 3
      %p179 = pnand %p177, %p178
      %p180 = pneg %p179
      // Predicated region
      $region9: #{classifier_copy_fcn_forward.1} parent=5 // pred_check
        _
      $region10: #{classifier_copy_fcn_forward.1} parent=5 // pred_check_branch
        %182 = sbr.rel (%p179) target = $region12
      $region11: #{classifier_copy_fcn_forward.1} parent=5 // pred_region
        %s183 = ssub.s32 %s14, 1
        // Predicated region
        $region13: #{classifier_copy_fcn_forward.1} parent=11 // pred_check
          %p184 = pneg %p101
        $region14: #{classifier_copy_fcn_forward.1} parent=11 // pred_check_branch
          %186 = sbr.rel (%p184) target = $region16
        $region15: #{classifier_copy_fcn_forward.1} parent=11 // pred_region
          _
        $region16: #{classifier_copy_fcn_forward.1} parent=11 // pred_fallthru
          _
        // Predicated region
        $region17: #{classifier_copy_fcn_forward.1} parent=11 // pred_check
          %p187 = pneg %p122
        $region18: #{classifier_copy_fcn_forward.1} parent=11 // pred_check_branch
          %189 = sbr.rel (%p187) target = $region20
        $region19: #{classifier_copy_fcn_forward.1} parent=11 // pred_region
          _
        $region20: #{classifier_copy_fcn_forward.1} parent=11 // pred_fallthru
          _
        // Predicated region
        $region21: #{classifier_copy_fcn_forward.1} parent=11 // pred_check
          %p190 = pneg %p143
        $region22: #{classifier_copy_fcn_forward.1} parent=11 // pred_check_branch
          %192 = sbr.rel (%p190) target = $region24
        $region23: #{classifier_copy_fcn_forward.1} parent=11 // pred_region
          _
        $region24: #{classifier_copy_fcn_forward.1} parent=11 // pred_fallthru
          _
      $region12: #{classifier_copy_fcn_forward.1} parent=5 // pred_fallthru
        _
      %p193 = scmp.lt.s32.totalorder %s14, 2
      // Predicated region
      $region25: #{classifier_copy_fcn_forward.1} parent=5 // pred_check
        %p194 = pneg %p193
      $region26: #{classifier_copy_fcn_forward.1} parent=5 // pred_check_branch
        %196 = sbr.rel (%p194) target = $region28
      $region27: #{classifier_copy_fcn_forward.1} parent=5 // pred_region
        // Predicated region
        $region29: #{classifier_copy_fcn_forward.1} parent=27 // pred_check
          %p197 = pneg %p48
        $region30: #{classifier_copy_fcn_forward.1} parent=27 // pred_check_branch
          %199 = sbr.rel (%p197) target = $region32
        $region31: #{classifier_copy_fcn_forward.1} parent=27 // pred_region
          %s200 = sand.u32 %s38, 1
          %s201 = sand.u32 %s38, 1
          %s202 = smul.addr %s201, 64
          %s203 = scalar_lea.vmem [#allocation3], %s202
          %s204 = smul.u32 2, %s21
          %s205 = smul.u32 4, %s22
          %s206 = smul.addr %s204, 8
          %s207 = sadd.s32 %s205, %s206
          %s208 = smul.addr %s207, 8
          %s209 = scalar_lea.vmem %s0, %s208
          // Predicated region
          $region33: #{classifier_copy_fcn_forward.1} parent=31 // pred_check
            _
          $region34: #{classifier_copy_fcn_forward.1} parent=31 // pred_check_branch
            %211 = sbr.rel (0) target = $region36
          $region35: #{classifier_copy_fcn_forward.1} parent=31 // pred_region
            // Predicated region
            $region37: #{classifier_copy_fcn_forward.1} parent=35 // pred_check
              _
            $region38: #{classifier_copy_fcn_forward.1} parent=35 // pred_check_branch
              %213 = sbr.rel (0) target = $region40
            $region39: #{classifier_copy_fcn_forward.1} parent=35 // pred_region
              loop: start=0, step=1, limit=1
              $region41: #{classifier_copy_fcn_forward.1} parent=39 // loop_pre_header
                _
              $region42: #{classifier_copy_fcn_forward.1} parent=39 // loop_header
                %s215 = sphi 0, %s219
                %p216 = scmp.ge.s32.totalorder %s215, 1
                %s220 = sphi %s209, %s209
                %s221 = sphi %s203, %s203
              $region43: #{classifier_copy_fcn_forward.1} parent=39 // loop_header_branch
                %218 = sbr.rel (%p216) target = $region47
              $region44: #{classifier_copy_fcn_forward.1} parent=39 // loop_body
                %v222 = vld [vmem:[%s220] sm:$0xff]
                %223 = vst [vmem:[%s221] sm:$0xff] %v222
                %v224 = vld [vmem:[%s220 + $0x8] sm:$0xff]
                %225 = vst [vmem:[%s221 + $0x8] sm:$0xff] %v224
                %v226 = vld [vmem:[%s220 + $0x10] sm:$0xff]
                %227 = vst [vmem:[%s221 + $0x10] sm:$0xff] %v226
                %v228 = vld [vmem:[%s220 + $0x18] sm:$0xff]
                %229 = vst [vmem:[%s221 + $0x18] sm:$0xff] %v228
                %v230 = vld [vmem:[%s220 + $0x40] sm:$0xff]
                %231 = vst [vmem:[%s221 + $0x20] sm:$0xff] %v230
                %v232 = vld [vmem:[%s220 + $0x48] sm:$0xff]
                %233 = vst [vmem:[%s221 + $0x28] sm:$0xff] %v232
                %v234 = vld [vmem:[%s220 + $0x50] sm:$0xff]
                %235 = vst [vmem:[%s221 + $0x30] sm:$0xff] %v234
                %v236 = vld [vmem:[%s220 + $0x58] sm:$0xff]
                %237 = vst [vmem:[%s221 + $0x38] sm:$0xff] %v236
              $region45: #{classifier_copy_fcn_forward.1} parent=39 // loop_footer
                %s219 = sadd.s32 1, %s215
              $region46: #{classifier_copy_fcn_forward.1} parent=39 // loop_footer_branch
                %214 = sbr.rel target = $region42
              $region47: #{classifier_copy_fcn_forward.1} parent=39 // loop_exit
                _
            $region40: #{classifier_copy_fcn_forward.1} parent=35 // pred_fallthru
              _
            // Predicated region
            $region48: #{classifier_copy_fcn_forward.1} parent=35 // pred_check
              _
            $region49: #{classifier_copy_fcn_forward.1} parent=35 // pred_check_branch
              %239 = sbr.rel target = $region51
            $region50: #{classifier_copy_fcn_forward.1} parent=35 // pred_region
              _
            $region51: #{classifier_copy_fcn_forward.1} parent=35 // pred_fallthru
              _
          $region36: #{classifier_copy_fcn_forward.1} parent=31 // pred_fallthru
            _
          %240 = vnop
        $region32: #{classifier_copy_fcn_forward.1} parent=27 // pred_fallthru
          _
        // Predicated region
        $region52: #{classifier_copy_fcn_forward.1} parent=27 // pred_check
          %p241 = pneg %p74
        $region53: #{classifier_copy_fcn_forward.1} parent=27 // pred_check_branch
          %243 = sbr.rel (%p241) target = $region55
        $region54: #{classifier_copy_fcn_forward.1} parent=27 // pred_region
          %s244 = sand.u32 %s64, 1
          %s245 = scalar_lea.sflag [#allocation5], %s244
          %s246 = sand.u32 %s64, 1
          %s247 = smul.addr %s246, 256
          %s248 = scalar_lea.vmem [#allocation4], %s247
          %s249 = smul.u32 64, %s22
          %251 = vsyncadd %s245, 0
          %s252 = smul.addr %s249, 4
          %s253 = scalar_lea.hbm %s1, %s252
          %s254 = sshll.u32 %s253, 4
          %s255 = int_to_ptr.hbm [resolvable:$true] %s254
          %s256 = sshll.u32 %s248, 4
          %s257 = int_to_ptr.vmem [resolvable:$true] %s256
          %262 = dma.hbm_to_vmem [thread:$0]  %s255, 4096, %s257, %s245, 64, 64, 4
        $region55: #{classifier_copy_fcn_forward.1} parent=27 // pred_fallthru
          _
      $region28: #{classifier_copy_fcn_forward.1} parent=5 // pred_fallthru
        _
      %p263 = scmp.le.s32.totalorder 1, %s14
      %p264 = scmp.lt.s32.totalorder %s14, 3
      %p265 = pnand %p263, %p264
      %p266 = pneg %p265
      // Predicated region
      $region56: #{classifier_copy_fcn_forward.1} parent=5 // pred_check
        _
      $region57: #{classifier_copy_fcn_forward.1} parent=5 // pred_check_branch
        %268 = sbr.rel (%p265) target = $region59
      $region58: #{classifier_copy_fcn_forward.1} parent=5 // pred_region
        %s269 = ssub.s32 %s14, 1
        %s270 = sand.u32 %s41, 1
        %s271 = sand.u32 %s41, 1
        %s272 = smul.addr %s271, 64
        %s273 = scalar_lea.vmem [#allocation3], %s272
        // Predicated region
        $region60: #{classifier_copy_fcn_forward.1} parent=58 // pred_check
          %p274 = pneg %p54
        $region61: #{classifier_copy_fcn_forward.1} parent=58 // pred_check_branch
          %276 = sbr.rel (%p274) target = $region63
        $region62: #{classifier_copy_fcn_forward.1} parent=58 // pred_region
          _
        $region63: #{classifier_copy_fcn_forward.1} parent=58 // pred_fallthru
          _
        %s277 = sand.u32 %s67, 1
        %s278 = scalar_lea.sflag [#allocation5], %s277
        %s279 = sand.u32 %s67, 1
        %s280 = smul.addr %s279, 256
        %s281 = scalar_lea.vmem [#allocation4], %s280
        // Predicated region
        $region64: #{classifier_copy_fcn_forward.1} parent=58 // pred_check
          %p282 = pneg %p80
        $region65: #{classifier_copy_fcn_forward.1} parent=58 // pred_check_branch
          %284 = sbr.rel (%p282) target = $region67
        $region66: #{classifier_copy_fcn_forward.1} parent=58 // pred_region
          %286 = dma.done %s278, 4096
        $region67: #{classifier_copy_fcn_forward.1} parent=58 // pred_fallthru
          _
        %s287 = sand.u32 %s41, 1
        %s288 = sand.u32 %s41, 1
        %s289 = smul.addr %s288, 64
        %s290 = scalar_lea.vmem [#allocation3], %s289
        %p291 = pneg %p54
        %p292 = pneg %p51
        %s293 = sand.u32 %s67, 1
        %s294 = scalar_lea.sflag [#allocation5], %s293
        %s295 = sand.u32 %s67, 1
        %s296 = smul.addr %s295, 256
        %s297 = scalar_lea.vmem [#allocation4], %s296
        %p298 = pneg %p80
        %p299 = pneg %p77
        %p300 = pneg %p101
        %p301 = pneg %p98
        %p302 = pneg %p122
        %p303 = pneg %p119
        %p304 = pneg %p143
        %p305 = pneg %p140
        %p306 = pneg %p169
        %p307 = pneg %p166
        %s308 = smul.u32 2, %s23
        %p309 = scmp.lt.s32.totalorder %s308, 1
        %s310 = scalar_select %p309, %s308, 1
        %s311 = smul.addr %s310, 8
        %s312 = scalar_lea.vmem %s5, %s311
        %s313 = smul.u32 2, %s23
        %s314 = smul.u32 4, %s24
        %s315 = smul.u32 64, %s24
        %s316 = smul.u32 2, %s23
        %p317 = scmp.lt.s32.totalorder %s316, 1
        %s318 = scalar_select %p317, %s316, 1
        %s319 = smul.addr %s318, 8
        %s320 = scalar_lea.vmem %s5, %s319
        %s321 = smul.u32 2, %s23
        %p322 = scmp.eq.s32.totalorder %s24, 0
        // Predicated region
        $region68: #{classifier_copy_fcn_forward.1} parent=58 // pred_check
          %p323 = pneg %p322
        $region69: #{classifier_copy_fcn_forward.1} parent=58 // pred_check_branch
          %325 = sbr.rel (%p323) target = $region71
        $region70: #{classifier_copy_fcn_forward.1} parent=58 // pred_region
          %326 = vst [vmem:[#allocation2] sm:$0xff] 0.0
          %327 = vst [vmem:[#allocation2 + $0x8] sm:$0xff] 0.0
        $region71: #{classifier_copy_fcn_forward.1} parent=58 // pred_fallthru
          _
        %v328 = vld [vmem:[%s273] sm:$0xff]
        %v329 = vld [vmem:[%s273 + $0x8] sm:$0xff]
        %v330 = vld [vmem:[%s273 + $0x10] sm:$0xff]
        %v331 = vld [vmem:[%s273 + $0x18] sm:$0xff]
        %v332 = vld [vmem:[%s273 + $0x20] sm:$0xff]
        %v333 = vld [vmem:[%s273 + $0x28] sm:$0xff]
        %v334 = vld [vmem:[%s273 + $0x30] sm:$0xff]
        %v335 = vld [vmem:[%s273 + $0x38] sm:$0xff]
        %v336 = vpack.c.bf16 %v332, %v328
        %v337 = vpack.c.bf16 %v333, %v329
        %v338 = vpack.c.bf16 %v334, %v330
        %v339 = vpack.c.bf16 %v335, %v331
        %v340 = vld [vmem:[#allocation2] sm:$0xff]
        %v341 = vld [vmem:[#allocation2 + $0x8] sm:$0xff]
        %v342 = vld [vmem:[%s281] sm:$0xf]
        %v343 = vld [vmem:[%s281 + $0x4] sm:$0xf]
        %v344 = vld [vmem:[%s281 + $0x8] sm:$0xf]
        %v345 = vld [vmem:[%s281 + $0xc] sm:$0xf]
        %v346 = vld [vmem:[%s281 + $0x10] sm:$0xf]
        %v347 = vld [vmem:[%s281 + $0x14] sm:$0xf]
        %v348 = vld [vmem:[%s281 + $0x18] sm:$0xf]
        %v349 = vld [vmem:[%s281 + $0x1c] sm:$0xf]
        %v350 = vld [vmem:[%s281 + $0x20] sm:$0xf]
        %v351 = vld [vmem:[%s281 + $0x24] sm:$0xf]
        %v352 = vld [vmem:[%s281 + $0x28] sm:$0xf]
        %v353 = vld [vmem:[%s281 + $0x2c] sm:$0xf]
        %v354 = vld [vmem:[%s281 + $0x30] sm:$0xf]
        %v355 = vld [vmem:[%s281 + $0x34] sm:$0xf]
        %v356 = vld [vmem:[%s281 + $0x38] sm:$0xf]
        %v357 = vld [vmem:[%s281 + $0x3c] sm:$0xf]
        %v358 = vld [vmem:[%s281 + $0x40] sm:$0xf]
        %v359 = vld [vmem:[%s281 + $0x44] sm:$0xf]
        %v360 = vld [vmem:[%s281 + $0x48] sm:$0xf]
        %v361 = vld [vmem:[%s281 + $0x4c] sm:$0xf]
        %v362 = vld [vmem:[%s281 + $0x50] sm:$0xf]
        %v363 = vld [vmem:[%s281 + $0x54] sm:$0xf]
        %v364 = vld [vmem:[%s281 + $0x58] sm:$0xf]
        %v365 = vld [vmem:[%s281 + $0x5c] sm:$0xf]
        %v366 = vld [vmem:[%s281 + $0x60] sm:$0xf]
        %v367 = vld [vmem:[%s281 + $0x64] sm:$0xf]
        %v368 = vld [vmem:[%s281 + $0x68] sm:$0xf]
        %v369 = vld [vmem:[%s281 + $0x6c] sm:$0xf]
        %v370 = vld [vmem:[%s281 + $0x70] sm:$0xf]
        %v371 = vld [vmem:[%s281 + $0x74] sm:$0xf]
        %v372 = vld [vmem:[%s281 + $0x78] sm:$0xf]
        %v373 = vld [vmem:[%s281 + $0x7c] sm:$0xf]
        %v374 = vld [vmem:[%s281 + $0x80] sm:$0xf]
        %v375 = vld [vmem:[%s281 + $0x84] sm:$0xf]
        %v376 = vld [vmem:[%s281 + $0x88] sm:$0xf]
        %v377 = vld [vmem:[%s281 + $0x8c] sm:$0xf]
        %v378 = vld [vmem:[%s281 + $0x90] sm:$0xf]
        %v379 = vld [vmem:[%s281 + $0x94] sm:$0xf]
        %v380 = vld [vmem:[%s281 + $0x98] sm:$0xf]
        %v381 = vld [vmem:[%s281 + $0x9c] sm:$0xf]
        %v382 = vld [vmem:[%s281 + $0xa0] sm:$0xf]
        %v383 = vld [vmem:[%s281 + $0xa4] sm:$0xf]
        %v384 = vld [vmem:[%s281 + $0xa8] sm:$0xf]
        %v385 = vld [vmem:[%s281 + $0xac] sm:$0xf]
        %v386 = vld [vmem:[%s281 + $0xb0] sm:$0xf]
        %v387 = vld [vmem:[%s281 + $0xb4] sm:$0xf]
        %v388 = vld [vmem:[%s281 + $0xb8] sm:$0xf]
        %v389 = vld [vmem:[%s281 + $0xbc] sm:$0xf]
        %v390 = vld [vmem:[%s281 + $0xc0] sm:$0xf]
        %v391 = vld [vmem:[%s281 + $0xc4] sm:$0xf]
        %v392 = vld [vmem:[%s281 + $0xc8] sm:$0xf]
        %v393 = vld [vmem:[%s281 + $0xcc] sm:$0xf]
        %v394 = vld [vmem:[%s281 + $0xd0] sm:$0xf]
        %v395 = vld [vmem:[%s281 + $0xd4] sm:$0xf]
        %v396 = vld [vmem:[%s281 + $0xd8] sm:$0xf]
        %v397 = vld [vmem:[%s281 + $0xdc] sm:$0xf]
        %v398 = vld [vmem:[%s281 + $0xe0] sm:$0xf]
        %v399 = vld [vmem:[%s281 + $0xe4] sm:$0xf]
        %v400 = vld [vmem:[%s281 + $0xe8] sm:$0xf]
        %v401 = vld [vmem:[%s281 + $0xec] sm:$0xf]
        %v402 = vld [vmem:[%s281 + $0xf0] sm:$0xf]
        %v403 = vld [vmem:[%s281 + $0xf4] sm:$0xf]
        %v404 = vld [vmem:[%s281 + $0xf8] sm:$0xf]
        %v405 = vld [vmem:[%s281 + $0xfc] sm:$0xf]
        %v470 = vunpack.c.l.b16 %v342
        %v471 = vunpack.c.l.b16 %v343
        %v472 = vunpack.c.l.b16 %v344
        %v473 = vunpack.c.l.b16 %v345
        %v474 = vunpack.c.l.b16 %v346
        %v475 = vunpack.c.l.b16 %v347
        %v476 = vunpack.c.l.b16 %v348
        %v477 = vunpack.c.l.b16 %v349
        %v478 = vunpack.c.l.b16 %v350
        %v479 = vunpack.c.l.b16 %v351
        %v480 = vunpack.c.l.b16 %v352
        %v481 = vunpack.c.l.b16 %v353
        %v482 = vunpack.c.l.b16 %v354
        %v483 = vunpack.c.l.b16 %v355
        %v484 = vunpack.c.l.b16 %v356
        %v485 = vunpack.c.l.b16 %v357
        %v486 = vunpack.c.l.b16 %v358
        %v487 = vunpack.c.l.b16 %v359
        %v488 = vunpack.c.l.b16 %v360
        %v489 = vunpack.c.l.b16 %v361
        %v490 = vunpack.c.l.b16 %v362
        %v491 = vunpack.c.l.b16 %v363
        %v492 = vunpack.c.l.b16 %v364
        %v493 = vunpack.c.l.b16 %v365
        %v494 = vunpack.c.l.b16 %v366
        %v495 = vunpack.c.l.b16 %v367
        %v496 = vunpack.c.l.b16 %v368
        %v497 = vunpack.c.l.b16 %v369
        %v498 = vunpack.c.l.b16 %v370
        %v499 = vunpack.c.l.b16 %v371
        %v500 = vunpack.c.l.b16 %v372
        %v501 = vunpack.c.l.b16 %v373
        %v502 = vunpack.c.l.b16 %v374
        %v503 = vunpack.c.l.b16 %v375
        %v504 = vunpack.c.l.b16 %v376
        %v505 = vunpack.c.l.b16 %v377
        %v506 = vunpack.c.l.b16 %v378
        %v507 = vunpack.c.l.b16 %v379
        %v508 = vunpack.c.l.b16 %v380
        %v509 = vunpack.c.l.b16 %v381
        %v510 = vunpack.c.l.b16 %v382
        %v511 = vunpack.c.l.b16 %v383
        %v512 = vunpack.c.l.b16 %v384
        %v513 = vunpack.c.l.b16 %v385
        %v514 = vunpack.c.l.b16 %v386
        %v515 = vunpack.c.l.b16 %v387
        %v516 = vunpack.c.l.b16 %v388
        %v517 = vunpack.c.l.b16 %v389
        %v518 = vunpack.c.l.b16 %v390
        %v519 = vunpack.c.l.b16 %v391
        %v520 = vunpack.c.l.b16 %v392
        %v521 = vunpack.c.l.b16 %v393
        %v522 = vunpack.c.l.b16 %v394
        %v523 = vunpack.c.l.b16 %v395
        %v524 = vunpack.c.l.b16 %v396
        %v525 = vunpack.c.l.b16 %v397
        %v526 = vunpack.c.l.b16 %v398
        %v527 = vunpack.c.l.b16 %v399
        %v528 = vunpack.c.l.b16 %v400
        %v529 = vunpack.c.l.b16 %v401
        %v530 = vunpack.c.l.b16 %v402
        %v531 = vunpack.c.l.b16 %v403
        %v532 = vunpack.c.l.b16 %v404
        %v533 = vunpack.c.l.b16 %v405
        %v534 = vpack.c.b16 %v471, %v470
        %v535 = vpack.c.b16 %v473, %v472
        %v536 = vpack.c.b16 %v475, %v474
        %v537 = vpack.c.b16 %v477, %v476
        %v538 = vpack.c.b16 %v479, %v478
        %v539 = vpack.c.b16 %v481, %v480
        %v540 = vpack.c.b16 %v483, %v482
        %v541 = vpack.c.b16 %v485, %v484
        %v542 = vpack.c.b16 %v487, %v486
        %v543 = vpack.c.b16 %v489, %v488
        %v544 = vpack.c.b16 %v491, %v490
        %v545 = vpack.c.b16 %v493, %v492
        %v546 = vpack.c.b16 %v495, %v494
        %v547 = vpack.c.b16 %v497, %v496
        %v548 = vpack.c.b16 %v499, %v498
        %v549 = vpack.c.b16 %v501, %v500
        %v550 = vpack.c.b16 %v503, %v502
        %v551 = vpack.c.b16 %v505, %v504
        %v552 = vpack.c.b16 %v507, %v506
        %v553 = vpack.c.b16 %v509, %v508
        %v554 = vpack.c.b16 %v511, %v510
        %v555 = vpack.c.b16 %v513, %v512
        %v556 = vpack.c.b16 %v515, %v514
        %v557 = vpack.c.b16 %v517, %v516
        %v558 = vpack.c.b16 %v519, %v518
        %v559 = vpack.c.b16 %v521, %v520
        %v560 = vpack.c.b16 %v523, %v522
        %v561 = vpack.c.b16 %v525, %v524
        %v562 = vpack.c.b16 %v527, %v526
        %v563 = vpack.c.b16 %v529, %v528
        %v564 = vpack.c.b16 %v531, %v530
        %v565 = vpack.c.b16 %v533, %v532
        %598 = vmatpush.bf16.msra.mxu0 %v541
        %599 = vmatpush.bf16.msra.mxu0 %v540
        %600 = vmatpush.bf16.msra.mxu0 %v539
        %601 = vmatpush.bf16.msra.mxu0 %v538
        %602 = vmatpush.bf16.msra.mxu0 %v537
        %603 = vmatpush.bf16.msra.mxu0 %v536
        %604 = vmatpush.bf16.msra.mxu0 %v535
        %605 = vmatpush.bf16.msra.mxu0 %v534
        %606 = vmatmul.bf16.gmra.mxu0 %v336
        %v607 = vpop.f32.mrf.mxu0
        %v608 = vadd.f32 0.0, %v607
        %v609 = vpop.f32.mrf.mxu0
        %v610 = vadd.f32 0.0, %v609
        %611 = vdwg.mxu0
        %612 = vmatpush.bf16.msra.mxu0 %v549
        %613 = vmatpush.bf16.msra.mxu0 %v548
        %614 = vmatpush.bf16.msra.mxu0 %v547
        %615 = vmatpush.bf16.msra.mxu0 %v546
        %616 = vmatpush.bf16.msra.mxu0 %v545
        %617 = vmatpush.bf16.msra.mxu0 %v544
        %618 = vmatpush.bf16.msra.mxu0 %v543
        %619 = vmatpush.bf16.msra.mxu0 %v542
        %620 = vmatmul.bf16.gmra.mxu0 %v337
        %v621 = vpop.f32.mrf.mxu0
        %v622 = vadd.f32 %v608, %v621
        %v623 = vpop.f32.mrf.mxu0
        %v624 = vadd.f32 %v610, %v623
        %625 = vdwg.mxu0
        %626 = vmatpush.bf16.msra.mxu0 %v557
        %627 = vmatpush.bf16.msra.mxu0 %v556
        %628 = vmatpush.bf16.msra.mxu0 %v555
        %629 = vmatpush.bf16.msra.mxu0 %v554
        %630 = vmatpush.bf16.msra.mxu0 %v553
        %631 = vmatpush.bf16.msra.mxu0 %v552
        %632 = vmatpush.bf16.msra.mxu0 %v551
        %633 = vmatpush.bf16.msra.mxu0 %v550
        %634 = vmatmul.bf16.gmra.mxu0 %v338
        %v635 = vpop.f32.mrf.mxu0
        %v636 = vadd.f32 %v622, %v635
        %v637 = vpop.f32.mrf.mxu0
        %v638 = vadd.f32 %v624, %v637
        %639 = vdwg.mxu0
        %640 = vmatpush.bf16.msra.mxu0 %v565
        %641 = vmatpush.bf16.msra.mxu0 %v564
        %642 = vmatpush.bf16.msra.mxu0 %v563
        %643 = vmatpush.bf16.msra.mxu0 %v562
        %644 = vmatpush.bf16.msra.mxu0 %v561
        %645 = vmatpush.bf16.msra.mxu0 %v560
        %646 = vmatpush.bf16.msra.mxu0 %v559
        %647 = vmatpush.bf16.msra.mxu0 %v558
        %648 = vmatmul.bf16.gmra.mxu0 %v339
        %v649 = vpop.f32.mrf.mxu0
        %v650 = vadd.f32 %v636, %v649
        %v651 = vpop.f32.mrf.mxu0
        %v652 = vadd.f32 %v638, %v651
        %653 = vdwg.mxu0
        %v654 = vadd.f32 %v340, %v650
        %v655 = vadd.f32 %v341, %v652
        %656 = vst [vmem:[#allocation2] sm:$0xff] %v654
        %657 = vst [vmem:[#allocation2 + $0x8] sm:$0xff] %v655
        %p658 = scmp.eq.s32.totalorder %s24, 1
        // Predicated region
        $region72: #{classifier_copy_fcn_forward.1} parent=58 // pred_check
          %p659 = pneg %p658
        $region73: #{classifier_copy_fcn_forward.1} parent=58 // pred_check_branch
          %661 = sbr.rel (%p659) target = $region75
        $region74: #{classifier_copy_fcn_forward.1} parent=58 // pred_region
          %v662 = vld [vmem:[#allocation2] sm:$0xff]
          %v663 = vld [vmem:[#allocation2 + $0x8] sm:$0xff]
          %v664 = vld [vmem:[%s2] sm:$0x1]
          %v666 = vperm.slane %v664, 0
          %v668 = vadd.f32 %v662, %v666
          %v669 = vadd.f32 %v663, %v666
          %v670 = vmax.f32 %v668, 0.0
          %v671 = vmax.f32 %v669, 0.0
          %v672 = vld [vmem:[%s3] sm:$0xff]
          %v673 = vld [vmem:[%s3 + $0x8] sm:$0xff]
          %v674 = vld [vmem:[%s3 + $0x10] sm:$0xff]
          %v675 = vld [vmem:[%s3 + $0x18] sm:$0xff]
          %v676 = vld [vmem:[%s3 + $0x20] sm:$0xff]
          %v677 = vld [vmem:[%s3 + $0x28] sm:$0xff]
          %v678 = vld [vmem:[%s3 + $0x30] sm:$0xff]
          %v679 = vld [vmem:[%s3 + $0x38] sm:$0xff]
          %v680 = vld [vmem:[%s3 + $0x40] sm:$0xff]
          %v681 = vld [vmem:[%s3 + $0x48] sm:$0xff]
          %v682 = vld [vmem:[%s3 + $0x50] sm:$0xff]
          %v683 = vld [vmem:[%s3 + $0x58] sm:$0xff]
          %v684 = vld [vmem:[%s3 + $0x60] sm:$0xff]
          %v685 = vld [vmem:[%s3 + $0x68] sm:$0xff]
          %v686 = vld [vmem:[%s3 + $0x70] sm:$0xff]
          %v687 = vld [vmem:[%s3 + $0x78] sm:$0xff]
          %v688 = vld [vmem:[%s4] sm:$0x1]
          %v690 = vperm.slane %v688, 0
          %692 = vmatpush.msra.mxu0 %v687
          %693 = vmatpush.msra.mxu0 %v686
          %694 = vmatpush.msra.mxu0 %v685
          %695 = vmatpush.msra.mxu0 %v684
          %696 = vmatpush.msra.mxu0 %v683
          %697 = vmatpush.msra.mxu0 %v682
          %698 = vmatpush.msra.mxu0 %v681
          %699 = vmatpush.msra.mxu0 %v680
          %700 = vmatpush.msra.mxu0 %v679
          %701 = vmatpush.msra.mxu0 %v678
          %702 = vmatpush.msra.mxu0 %v677
          %703 = vmatpush.msra.mxu0 %v676
          %704 = vmatpush.msra.mxu0 %v675
          %705 = vmatpush.msra.mxu0 %v674
          %706 = vmatpush.msra.mxu0 %v673
          %707 = vmatpush.msra.mxu0 %v672
          %708 = vmatmul.f32.gmra.mxu0 %v670
          %v709 = vpop.f32.mrf.mxu0
          %v710 = vadd.f32 %v690, %v709
          %711 = vmatmul.f32.gmra.mxu0 %v671
          %v712 = vpop.f32.mrf.mxu0
          %v713 = vadd.f32 %v690, %v712
          %714 = vdwg.mxu0
          %715 = vst [vmem:[%s320] sm:$0xff] %v710
          %716 = vst [vmem:[%s320 + $0x8] sm:$0xff] %v713
        $region75: #{classifier_copy_fcn_forward.1} parent=58 // pred_fallthru
          _
        %s717 = smul.u32 2, %s23
        %p718 = scmp.lt.s32.totalorder %s717, 1
        %s719 = scalar_select %p718, %s717, 1
        %s720 = smul.addr %s719, 8
        %s721 = scalar_lea.vmem %s5, %s720
        // Predicated region
        $region76: #{classifier_copy_fcn_forward.1} parent=58 // pred_check
          %p722 = pneg %p166
        $region77: #{classifier_copy_fcn_forward.1} parent=58 // pred_check_branch
          %724 = sbr.rel (%p722) target = $region79
        $region78: #{classifier_copy_fcn_forward.1} parent=58 // pred_region
          %s725 = smul.u32 2, %s23
        $region79: #{classifier_copy_fcn_forward.1} parent=58 // pred_fallthru
          _
        // Predicated region
        $region80: #{classifier_copy_fcn_forward.1} parent=58 // pred_check
          %p726 = pneg %p166
        $region81: #{classifier_copy_fcn_forward.1} parent=58 // pred_check_branch
          %728 = sbr.rel (%p726) target = $region83
        $region82: #{classifier_copy_fcn_forward.1} parent=58 // pred_region
          %s729 = smul.u32 2, %s23
          %p730 = scmp.lt.s32.totalorder %s729, 1
          %s731 = scalar_select %p730, %s729, 1
          %s732 = smul.addr %s731, 8
          %s733 = scalar_lea.vmem %s5, %s732
        $region83: #{classifier_copy_fcn_forward.1} parent=58 // pred_fallthru
          _
      $region59: #{classifier_copy_fcn_forward.1} parent=5 // pred_fallthru
        _
      %p734 = scmp.le.s32.totalorder 2, %s14
      // Predicated region
      $region84: #{classifier_copy_fcn_forward.1} parent=5 // pred_check
        %p735 = pneg %p734
      $region85: #{classifier_copy_fcn_forward.1} parent=5 // pred_check_branch
        %737 = sbr.rel (%p735) target = $region87
      $region86: #{classifier_copy_fcn_forward.1} parent=5 // pred_region
        %s738 = ssub.s32 %s14, 2
      $region87: #{classifier_copy_fcn_forward.1} parent=5 // pred_fallthru
        _
    $region6: #{classifier_copy_fcn_forward.1} parent=1 // loop_footer
      %s18 = sadd.s32 1, %s14
    $region7: #{classifier_copy_fcn_forward.1} parent=1 // loop_footer_branch
      %13 = sbr.rel target = $region3
    $region8: #{classifier_copy_fcn_forward.1} parent=1 // loop_exit
      _
    %739 = vsyncpa [#allocation5], 1
    %s740 = scalar_lea.sflag [#allocation5], 1
    %741 = vsyncpa %s740, 1

</llo_original>
